<compile_context>
chip_gen: v7x
topology: tpu7x:2x2x1
jax: 0.10.0
libtpu: 0.0.40
codegen_flags: <defaults>
</compile_context>

<pallas_src>
import jax
import jax.numpy as jnp
from jax.experimental import pallas as pl
from jax.experimental.pallas import tpu as pltpu

_LANES = 128


def _intensity_kernel(noise_ref, x_ref, o_ref):
    # noise_ref: (bb, 1) f32 per-sample multiplicative noise.
    # x_ref / o_ref: (bb, fb) slab of flattened samples.
    noise = noise_ref[...].astype(o_ref.dtype)      # cast once; lane-broadcast
    o_ref[...] = x_ref[...] * noise


def _default_block_bytes():
    # Larger blocks fit comfortably inside the default scoped VMEM of v6e/v7x
    # (32 MiB); stay conservative elsewhere (v5e default scoped VMEM: 16 MiB).
    try:
        kind = jax.devices()[0].device_kind.lower()
    except Exception:
        kind = ""
    if "v6" in kind or "v7" in kind:
        return 4 << 20
    return 2 << 20


def _choose_blocks(B, F, dsize, target_bytes):
    """Pick a (bb, fb) block over the (B, F) view moving ~target_bytes/step."""
    # Dtype-aware sublane multiple: 8 (f32), 16 (bf16), 32 (int8/fp8).
    sub = max(8, 32 // max(1, dsize))
    row_bytes = max(1, F * dsize)

    # Batch block: pack as many whole samples per step as fit the byte budget.
    if B <= sub:
        bb = B
    else:
        bb_des = max(1, target_bytes // row_bytes)
        if bb_des >= B:
            bb = B
        else:
            bb = max(sub, (bb_des // sub) * sub)
            bb = min(bb, (B // sub) * sub)

    # Feature block: whole row when it fits, else split on 128-lane multiples.
    if bb * row_bytes <= target_bytes:
        fb = F
    else:
        fb_des = max(1, target_bytes // max(1, bb * dsize))
        fb = max(_LANES, (fb_des // _LANES) * _LANES)
        fb = min(fb, max(_LANES, (F // _LANES) * _LANES))
    return bb, fb


def intensity_forward(x, r, scale, *, block_bytes=None):
    """Pallas TPU equivalent of Intensity.forward.

    x:     (B, C, H, W) float array.
    r:     (B,) standard-normal per-sample draws (the torch.randn((B,1,1,1))).
    scale: Python float or traced scalar.
    """
    B, C, H, W = x.shape
    F = C * H * W
    dsize = x.dtype.itemsize
    if block_bytes is None:
        block_bytes = _default_block_bytes()

    # Per-sample multiplicative noise: 1 + scale * clamp(r, -2, 2).
    # (jnp math on `scale` so it also works when scale is a traced value.)
    noise = (jnp.float32(1.0)
             + jnp.asarray(scale, jnp.float32)
             * jnp.clip(r.astype(jnp.float32), -2.0, 2.0))
    noise2 = noise.reshape(B, 1)

    # Flatten each sample into one contiguous row; no padding / slicing passes.
    x2 = x.reshape(B, F)

    bb, fb = _choose_blocks(B, F, dsize, block_bytes)
    grid = (pl.cdiv(B, bb), pl.cdiv(F, fb))

    out2 = pl.pallas_call(
        _intensity_kernel,
        out_shape=jax.ShapeDtypeStruct((B, F), x.dtype),
        grid_spec=pltpu.PrefetchScalarGridSpec(
            num_scalar_prefetch=0,
            grid=grid,
            in_specs=[
                pl.BlockSpec((bb, 1), lambda i, j: (i, 0)),    # per-sample noise
                pl.BlockSpec((bb, fb), lambda i, j: (i, j)),   # x slab
            ],
            out_specs=pl.BlockSpec((bb, fb), lambda i, j: (i, j)),
        ),
        compiler_params=pltpu.CompilerParams(
            dimension_semantics=("parallel", "parallel"),
        ),
        # Output may reuse x's HBM buffer when the caller donates it.
        input_output_aliases={1: 0},
    )(noise2, x2)

    return out2.reshape(B, C, H, W)


if __name__ == "__main__":
    key = jax.random.PRNGKey(0)
    kx, kr = jax.random.split(key)

    B, C, H, W = 2, 4, 16, 16
    scale = 0.1

    x = jax.random.normal(kx, (B, C, H, W), dtype=jnp.float32)
    # Per-sample gaussian draw (equivalent of torch.randn((B,1,1,1)) in the
    # PyTorch module); clamp/scale/broadcast-multiply happen around/inside the
    # kernel.
    r = jax.random.normal(kr, (B,), dtype=jnp.float32)

    # Pure-JAX reference (computed before the kernel call).
    noise_ref = 1.0 + scale * jnp.clip(r, -2.0, 2.0)
    ref = x * noise_ref.reshape(B, 1, 1, 1)
    ref = jax.block_until_ready(ref)

    out = intensity_forward(x, r, scale)
    jax.block_until_ready(out)

    assert out.shape == x.shape and out.dtype == x.dtype
    assert jnp.allclose(out, ref, atol=1e-5, rtol=1e-5), "mismatch vs reference"

    print("KERNEL_OK")
</pallas_src>

<mosaic_0001>
module attributes {stable_mosaic.version = 11 : i64} {
  func.func @_intensity_kernel(%arg0: i32, %arg1: i32, %arg2: memref<2x1xf32, #tpu.memory_space<vmem>>, %arg3: memref<2x1024xf32, #tpu.memory_space<vmem>>, %arg4: memref<2x1024xf32, #tpu.memory_space<vmem>>) attributes {dimension_semantics = [#tpu.dimension_semantics<parallel>, #tpu.dimension_semantics<parallel>], iteration_bounds = array<i64: 1, 1>, scalar_prefetch = 0 : i64, scratch_operands = 0 : i64, tpu.core_type = #tpu.core_type<tc>, window_params = [{transform_indices = @transform_0, window_bounds = array<i64: 2, 1>}, {transform_indices = @transform_1, window_bounds = array<i64: 2, 1024>}, {transform_indices = @transform_2, window_bounds = array<i64: 2, 1024>}]} {
    %c0 = arith.constant 0 : index
    %c0_0 = arith.constant 0 : index
    %0 = vector.load %arg2[%c0, %c0_0] : memref<2x1xf32, #tpu.memory_space<vmem>>, vector<2x1xf32>
    %c0_1 = arith.constant 0 : index
    %c0_2 = arith.constant 0 : index
    %1 = vector.load %arg3[%c0_1, %c0_2] : memref<2x1024xf32, #tpu.memory_space<vmem>>, vector<2x1024xf32>
    %2 = vector.broadcast %0 : vector<2x1xf32> to vector<2x1024xf32>
    %3 = arith.mulf %1, %2 : vector<2x1024xf32>
    %c0_3 = arith.constant 0 : index
    %c0_4 = arith.constant 0 : index
    %4 = vector.load %arg4[%c0_3, %c0_4] : memref<2x1024xf32, #tpu.memory_space<vmem>>, vector<2x1024xf32>
    tpu.vector_store %arg4[%c0_3, %c0_4], %3 {strides = array<i32>} : memref<2x1024xf32, #tpu.memory_space<vmem>>, vector<2x1024xf32>,
    return
  }
  func.func @transform_0(%arg0: i32, %arg1: i32) -> (i32, i32) {
    %c0_i32 = arith.constant 0 : i32
    %c0_i32_0 = arith.constant 0 : i32
    return %arg0, %c0_i32 : i32, i32
  }
  func.func @transform_1(%arg0: i32, %arg1: i32) -> (i32, i32) {
    %c0_i32 = arith.constant 0 : i32
    return %arg0, %arg1 : i32, i32
  }
  func.func @transform_2(%arg0: i32, %arg1: i32) -> (i32, i32) {
    %c0_i32 = arith.constant 0 : i32
    return %arg0, %arg1 : i32, i32
  }
}

</mosaic_0001>

<llo_original>
// kernel: tpu_custom_call.1
$region0: #{tpu_custom_call.1}
  #allocation0 [shape = 'u32[]', space=smem, size = 0x4, offset = 0x4, fixed_abs, tag = 'smem constant byte address 0x4 - core index']
  #allocation1 [shape = 'u32[144,128]{1,0:T(1,128)}', space=vmem, size = 0x12000, scoped, tag = 'internal scratch']
  %s0 = inlined_call_operand.vmem [shape: f32[2,1], index: 0, kind: input, shape index: {}]
  %s1 = inlined_call_operand.hbm [shape: f32[2,1024], index: 1, kind: input, shape index: {}, may-alias: {1,2}]
  %s2 = inlined_call_operand.hbm [shape: f32[2,1024], index: 2, kind: output, shape index: {}, may-alias: {1,2}]
  %s3 = sld [smem:[#allocation0]]
  $region22: #{tpu_custom_call.1} parent=0
    _
  %s5 = ssub.s32 1, %s3
  %s6 = scalar_select 0, %s5, %s3
  $region1: #{tpu_custom_call.1} parent=0
    #allocation2 [shape = 'u8[8192]{0}', space=vmem, size = 0x2000, scoped, tag = 'input window, operand 1, single buffered']
    #allocation3 [shape = 's32[1]{0}', space=sflag, size = 0x4, scoped, tag = 'scoped memory for tpu_custom_call.1']
    #allocation4 [shape = 's32[1]{0}', space=sflag, size = 0x4, scoped, tag = 'scoped memory for tpu_custom_call.1']
    #allocation5 [shape = 'u8[8192]{0}', space=vmem, size = 0x2000, scoped, tag = 'output window, operand 0, single buffered']
    %7 = vsyncpa [#allocation3], 0
    %8 = vsyncpa [#allocation4], 0
    // Predicated region
    $region2: #{tpu_custom_call.1} parent=1 // pred_check
      _
    $region3: #{tpu_custom_call.1} parent=1 // pred_check_branch
      %10 = sbr.rel (0) target = $region5
    $region4: #{tpu_custom_call.1} parent=1 // pred_region
      _
    $region5: #{tpu_custom_call.1} parent=1 // pred_fallthru
      _
    // Predicated region
    $region6: #{tpu_custom_call.1} parent=1 // pred_check
      _
    $region7: #{tpu_custom_call.1} parent=1 // pred_check_branch
      %12 = sbr.rel (0) target = $region9
    $region8: #{tpu_custom_call.1} parent=1 // pred_region
      %s14 = ssub.s32 256, 256
      %15 = vsyncadd [#allocation3], %s14
      %s17 = sshll.u32 [#allocation2], 4
      %s18 = int_to_ptr.vmem [resolvable:$true] %s17
      %20 = dma.hbm_to_vmem [thread:$0]  %s1, 256, %s18, [#allocation3]
    $region9: #{tpu_custom_call.1} parent=1 // pred_fallthru
      _
    // Predicated region
    $region10: #{tpu_custom_call.1} parent=1 // pred_check
      _
    $region11: #{tpu_custom_call.1} parent=1 // pred_check_branch
      %22 = sbr.rel (0) target = $region13
    $region12: #{tpu_custom_call.1} parent=1 // pred_region
      %23 = dma.done [#allocation3], 256
    $region13: #{tpu_custom_call.1} parent=1 // pred_fallthru
      _
    %v24 = vld [vmem:[%s0] sm:$0x3]
    %v25 = vld [vmem:[#allocation2] sm:$0xff]
    %v26 = vld [vmem:[#allocation2 + $0x8] sm:$0xff]
    %28 = vset.pattern.permute.xlu0 0
    %29 = vperm.xlu0 %28, %v24
    %v30 = vpop.permute.xlu0 %29
    %v32 = vunpack.c.l.s4 269488144
    %v33 = vunpack.c.0.s8 %v32
    %v34 = vlaneseq
    %v35 = vshrl.u32 %v34, 7
    %v36 = vsub.s32 %v33, %v35
    %v37 = vrot.slane %v30, %v36
    %v39 = vmul.f32 %v25, %v37
    %v40 = vmul.f32 %v26, %v37
    %41 = vst [vmem:[#allocation5] sm:$0xff] %v39
    %42 = vst [vmem:[#allocation5 + $0x8] sm:$0xff] %v40
    // Predicated region
    $region14: #{tpu_custom_call.1} parent=1 // pred_check
      _
    $region15: #{tpu_custom_call.1} parent=1 // pred_check_branch
      %44 = sbr.rel (0) target = $region17
    $region16: #{tpu_custom_call.1} parent=1 // pred_region
      %s46 = ssub.s32 256, 256
      %47 = vsyncadd [#allocation4], %s46
      %s49 = sshll.u32 [#allocation5], 4
      %s50 = int_to_ptr.vmem [resolvable:$true] %s49
      %52 = dma.vmem_to_hbm [thread:$0]  %s50, 256, %s2, [#allocation4]
    $region17: #{tpu_custom_call.1} parent=1 // pred_fallthru
      _
    // Predicated region
    $region18: #{tpu_custom_call.1} parent=1 // pred_check
      _
    $region19: #{tpu_custom_call.1} parent=1 // pred_check_branch
      %54 = sbr.rel (0) target = $region21
    $region20: #{tpu_custom_call.1} parent=1 // pred_region
      %55 = dma.done [#allocation4], 256
    $region21: #{tpu_custom_call.1} parent=1 // pred_fallthru
      _
    %56 = vsyncpa [#allocation3], 1
    %57 = vsyncpa [#allocation4], 1

</llo_original>
